<compile_context>
chip_gen: v5e
topology: v5e:2x2
jax: 0.10.0
libtpu: 0.0.40
codegen_flags: <defaults>
</compile_context>

<pallas_src>
import jax
import jax.numpy as jnp
from jax.experimental import pallas as pl
from jax.experimental.pallas import tpu as pltpu

_LANES = 128
_TARGET_TILE_BYTES = 8 * 1024 * 1024      # per-block target (in OR out)
_VMEM_LIMIT_BYTES = 48 * 1024 * 1024      # 4x tile (double-buffered in+out) + headroom;
                                          # safe on v5e/v6e (128 MiB) and v7x (64 MiB/TC)
_SPLIT_THRESHOLD_BYTES = 2 * 1024 * 1024  # above this, force >=2 blocks for v7x's 2 TCs


def _relu_kernel(x_ref, o_ref):
    # Single VPU op per vreg; no broadcast zero tile materialized.
    o_ref[...] = jnp.maximum(x_ref[...], 0)


def _sublane_multiple(itemsize):
    """Packed sublane tile: 8 for 32-bit, 16 for 16-bit, 32 for 8-bit dtypes."""
    return max(8, 32 // itemsize)


def _pick_lanes(n, sub):
    """Widest lane dim (multiple of 128) dividing n, preferring >= sub rows."""
    for lanes in (2048, 1024, 512, 256, 128):
        if n % lanes == 0 and n // lanes >= sub:
            return lanes
    for lanes in (2048, 1024, 512, 256, 128):
        if n % lanes == 0:
            return lanes
    return _LANES


def _relu_2d(x2d):
    """Pallas ReLU over a lane-dense 2D slab [R, L] (L a multiple of 128)."""
    R, L = x2d.shape
    itemsize = jnp.dtype(x2d.dtype).itemsize
    sub = _sublane_multiple(itemsize)
    total_bytes = R * L * itemsize

    # Rows per tile: ~_TARGET_TILE_BYTES, floored to the packed sublane
    # multiple so every interior block keeps unmasked stores / clean layout.
    tile_rows = max(sub, _TARGET_TILE_BYTES // (L * itemsize))
    tile_rows = (tile_rows // sub) * sub

    if tile_rows >= R:
        # Whole slab fits one block.  If it is non-trivial, split into >=2
        # blocks so the "parallel" grid axis can shard across v7x's 2 TCs.
        if total_bytes >= _SPLIT_THRESHOLD_BYTES and R > sub:
            half = pl.cdiv(R, 2)
            half = ((half + sub - 1) // sub) * sub
            tile_rows = half if half < R else R
        else:
            tile_rows = R  # full-extent block is always layout-legal

    grid = (pl.cdiv(R, tile_rows),)  # uneven last block -> masked edge write

    return pl.pallas_call(
        _relu_kernel,
        out_shape=jax.ShapeDtypeStruct((R, L), x2d.dtype),
        grid_spec=pltpu.PrefetchScalarGridSpec(
            num_scalar_prefetch=0,
            grid=grid,
            in_specs=[pl.BlockSpec((tile_rows, L), lambda i: (i, 0))],
            out_specs=pl.BlockSpec((tile_rows, L), lambda i: (i, 0)),
        ),
        compiler_params=pltpu.CompilerParams(
            dimension_semantics=("parallel",),  # shards grid across v7x's 2 TCs
            vmem_limit_bytes=_VMEM_LIMIT_BYTES,
        ),
        cost_estimate=pl.CostEstimate(
            flops=R * L,
            transcendentals=0,
            bytes_accessed=2 * R * L * itemsize,
        ),
    )(x2d)


def custom_relu(x):
    """Pallas equivalent of CustomReLU.forward: F.relu(input).

    Accepts any shape/dtype; returns an array of identical shape and dtype.
    """
    orig_shape = x.shape
    n = x.size
    if n == 0:
        return x

    itemsize = jnp.dtype(x.dtype).itemsize
    sub = _sublane_multiple(itemsize)

    if n % _LANES == 0:
        # Fast path (the common NCHW case): one contiguous reshape in/out,
        # no pads, no slices — exactly one HBM read + one HBM write.
        lanes = _pick_lanes(n, sub)
        y2d = _relu_2d(jnp.ravel(x).reshape(n // lanes, lanes))
        return y2d.reshape(orig_shape)

    # Awkward sizes: a standalone pad + slice around the custom call would
    # triple HBM traffic, and XLA's fused elementwise maximum already sits at
    # the HBM roofline — so just use it.
    return jnp.maximum(x, 0).astype(x.dtype)


if __name__ == "__main__":
    key = jax.random.PRNGKey(0)

    # NCHW input, same convention as the PyTorch module.
    x = jax.random.normal(key, (2, 4, 16, 16), dtype=jnp.float32)
    y = custom_relu(x)
    jax.block_until_ready(y)
    ref = jnp.maximum(x, 0.0)
    assert y.shape == x.shape and y.dtype == x.dtype
    assert jnp.allclose(y, ref), "mismatch vs reference ReLU (fast path)"

    # Larger 128-multiple input: exercises the multi-block (>=2 grid steps) path.
    x1 = jax.random.normal(jax.random.PRNGKey(2), (8, 16, 32, 32), dtype=jnp.float32)
    y1 = custom_relu(x1)
    jax.block_until_ready(y1)
    assert jnp.allclose(y1, jnp.maximum(x1, 0.0)), "mismatch vs reference ReLU (big path)"

    # Awkward size (105 elements): exercises the XLA-fallback path.
    x2 = jax.random.normal(jax.random.PRNGKey(1), (3, 5, 7), dtype=jnp.float32)
    y2 = custom_relu(x2)
    jax.block_until_ready(y2)
    assert y2.shape == x2.shape and y2.dtype == x2.dtype
    assert jnp.allclose(y2, jnp.maximum(x2, 0.0)), "mismatch vs reference ReLU (fallback)"

    # bf16 input: exercises dtype-aware sublane rounding (packed rows).
    x3 = jax.random.normal(jax.random.PRNGKey(3), (2, 4, 16, 16), dtype=jnp.bfloat16)
    y3 = custom_relu(x3)
    jax.block_until_ready(y3)
    assert y3.dtype == x3.dtype
    assert jnp.allclose(y3.astype(jnp.float32),
                        jnp.maximum(x3, 0).astype(jnp.float32)), "mismatch (bf16 path)"

    print("KERNEL_OK")
</pallas_src>

<mosaic_0001>
module attributes {stable_mosaic.version = 11 : i64} {
  func.func @_relu_kernel(%arg0: i32, %arg1: memref<8x256xf32, #tpu.memory_space<vmem>>, %arg2: memref<8x256xf32, #tpu.memory_space<vmem>>) attributes {dimension_semantics = [#tpu.dimension_semantics<parallel>], iteration_bounds = array<i64: 1>, scalar_prefetch = 0 : i64, scratch_operands = 0 : i64, tpu.core_type = #tpu.core_type<tc>, window_params = [{transform_indices = @transform_0, window_bounds = array<i64: 8, 256>}, {transform_indices = @transform_1, window_bounds = array<i64: 8, 256>}]} {
    %c0 = arith.constant 0 : index
    %c0_0 = arith.constant 0 : index
    %0 = vector.load %arg1[%c0, %c0_0] : memref<8x256xf32, #tpu.memory_space<vmem>>, vector<8x256xf32>
    %cst = arith.constant 0.000000e+00 : f32
    %1 = vector.broadcast %cst : f32 to vector<8x256xf32>
    %2 = arith.maximumf %0, %1 : vector<8x256xf32>
    %c0_1 = arith.constant 0 : index
    %c0_2 = arith.constant 0 : index
    %3 = vector.load %arg2[%c0_1, %c0_2] : memref<8x256xf32, #tpu.memory_space<vmem>>, vector<8x256xf32>
    tpu.vector_store %arg2[%c0_1, %c0_2], %2 {strides = array<i32>} : memref<8x256xf32, #tpu.memory_space<vmem>>, vector<8x256xf32>,
    return
  }
  func.func @transform_0(%arg0: i32) -> (i32, i32) {
    %c0_i32 = arith.constant 0 : i32
    %c0_i32_0 = arith.constant 0 : i32
    return %arg0, %c0_i32 : i32, i32
  }
  func.func @transform_1(%arg0: i32) -> (i32, i32) {
    %c0_i32 = arith.constant 0 : i32
    %c0_i32_0 = arith.constant 0 : i32
    return %arg0, %c0_i32 : i32, i32
  }
}

</mosaic_0001>

<llo_original>
// kernel: tpu_custom_call.1
$region0: #{tpu_custom_call.1}
  #allocation0 [shape = 'u32[]', space=smem, size = 0x4, offset = 0x4, fixed_abs, tag = 'smem constant byte address 0x4 - core index']
  #allocation1 [shape = 'u32[72,128]{1,0:T(1,128)}', space=vmem, size = 0x9000, scoped, tag = 'internal scratch']
  %s0 = inlined_call_operand.hbm [shape: f32[8,256], index: 0, kind: input, shape index: {}]
  %s1 = inlined_call_operand.hbm [shape: f32[8,256], index: 1, kind: output, shape index: {}]
  %s2 = sld [smem:[#allocation0]]
  $region18: #{tpu_custom_call.1} parent=0
    _
  %s4 = ssub.s32 1, %s2
  %s5 = scalar_select 0, %s4, %s2
  $region1: #{tpu_custom_call.1} parent=0
    #allocation2 [shape = 'u8[8192]{0}', space=vmem, size = 0x2000, scoped, tag = 'input window, operand 0, single buffered']
    #allocation3 [shape = 's32[1]{0}', space=sflag, size = 0x4, scoped, tag = 'scoped memory for tpu_custom_call.1']
    #allocation4 [shape = 's32[1]{0}', space=sflag, size = 0x4, scoped, tag = 'scoped memory for tpu_custom_call.1']
    #allocation5 [shape = 'u8[8192]{0}', space=vmem, size = 0x2000, scoped, tag = 'output window, operand 0, single buffered']
    %6 = vsyncpa [#allocation3], 0
    %7 = vsyncpa [#allocation4], 0
    // Predicated region
    $region2: #{tpu_custom_call.1} parent=1 // pred_check
      _
    $region3: #{tpu_custom_call.1} parent=1 // pred_check_branch
      %9 = sbr.rel (0) target = $region5
    $region4: #{tpu_custom_call.1} parent=1 // pred_region
      %11 = vsyncadd [#allocation3], 0
      %s13 = sshll.u32 %s0, 4
      %s14 = int_to_ptr.hbm [resolvable:$true] %s13
      %s15 = sshll.u32 [#allocation2], 4
      %s16 = int_to_ptr.vmem [resolvable:$true] %s15
      %18 = dma.hbm_to_vmem [thread:$0]  %s14, 256, %s16, [#allocation3]
    $region5: #{tpu_custom_call.1} parent=1 // pred_fallthru
      _
    // Predicated region
    $region6: #{tpu_custom_call.1} parent=1 // pred_check
      _
    $region7: #{tpu_custom_call.1} parent=1 // pred_check_branch
      %20 = sbr.rel (0) target = $region9
    $region8: #{tpu_custom_call.1} parent=1 // pred_region
      %22 = dma.done [#allocation3], 256
    $region9: #{tpu_custom_call.1} parent=1 // pred_fallthru
      _
    %v23 = vld [vmem:[#allocation2] sm:$0xff]
    %v24 = vld [vmem:[#allocation2 + $0x8] sm:$0xff]
    %v25 = vmax.f32 %v23, 0.0
    %v26 = vmax.f32 %v24, 0.0
    %27 = vst [vmem:[#allocation5] sm:$0xff] %v25
    %28 = vst [vmem:[#allocation5 + $0x8] sm:$0xff] %v26
    // Predicated region
    $region10: #{tpu_custom_call.1} parent=1 // pred_check
      _
    $region11: #{tpu_custom_call.1} parent=1 // pred_check_branch
      %30 = sbr.rel (0) target = $region13
    $region12: #{tpu_custom_call.1} parent=1 // pred_region
      %32 = vsyncadd [#allocation4], 0
      %s34 = sshll.u32 [#allocation5], 4
      %s35 = int_to_ptr.vmem [resolvable:$true] %s34
      %s36 = sshll.u32 %s1, 4
      %s37 = int_to_ptr.hbm [resolvable:$true] %s36
      %39 = dma.vmem_to_hbm [thread:$0]  %s35, 256, %s37, [#allocation4]
    $region13: #{tpu_custom_call.1} parent=1 // pred_fallthru
      _
    // Predicated region
    $region14: #{tpu_custom_call.1} parent=1 // pred_check
      _
    $region15: #{tpu_custom_call.1} parent=1 // pred_check_branch
      %41 = sbr.rel (0) target = $region17
    $region16: #{tpu_custom_call.1} parent=1 // pred_region
      %43 = dma.done [#allocation4], 256
    $region17: #{tpu_custom_call.1} parent=1 // pred_fallthru
      _
    %44 = vsyncpa [#allocation3], 1
    %45 = vsyncpa [#allocation4], 1

</llo_original>
